<compile_context>
chip_gen: v6e
topology: v6e:2x2x1
jax: 0.10.0
libtpu: 0.0.40
codegen_flags: <defaults>
</compile_context>

<pallas_src>
import functools
import math

import jax
import jax.numpy as jnp
from jax.experimental import pallas as pl
from jax.experimental.pallas import tpu as pltpu


# ---------------------------------------------------------------------------
# Kernel: one fused matmul per token tile.
#   q_ref: (T, dim)            -- tile of query rows
#   w_ref: (dim, 2*num_keys)   -- folded block-diagonal key weight (VMEM-resident)
#   o_ref: (T, 2*num_keys)     -- dots, already in the final (flattened) layout
# ---------------------------------------------------------------------------
def _pkm_kernel(q_ref, w_ref, o_ref):
    o_ref[...] = jnp.dot(
        q_ref[...], w_ref[...], preferred_element_type=jnp.float32
    ).astype(o_ref.dtype)


# ---------------------------------------------------------------------------
# Wrapper: ProductKeyMemory.forward
# ---------------------------------------------------------------------------
def product_key_memory_forward(query, keys, *, token_tile=512):
    B, dim = query.shape
    num_keys, dk = keys.shape
    assert dim == 2 * dk, "dim must be even and match keys' feature dim"

    # Fold the two half-matmuls (q[:, :dk] @ keys.T and q[:, dk:] @ keys.T) into one
    # block-diagonal weight so the kernel is a single MXU matmul.
    kt = keys.T.astype(jnp.float32)                      # (dk, num_keys)
    z = jnp.zeros((dk, num_keys), jnp.float32)
    w_sim = jnp.concatenate(
        [jnp.concatenate([kt, z], axis=1),
         jnp.concatenate([z, kt], axis=1)],
        axis=0,
    )                                                    # (dim, 2*num_keys)

    # Token tiling: large tiles when there are many rows; a single full-size block
    # (block dims == array dims, always legal) when the input is small.
    if B <= token_tile:
        T, Bp = B, B
        q = query.astype(jnp.float32)
    else:
        T = token_tile                                   # multiple of 8 (sublane-friendly)
        Bp = math.ceil(B / T) * T
        q = jnp.zeros((Bp, dim), jnp.float32).at[:B].set(query.astype(jnp.float32))

    out = pl.pallas_call(
        _pkm_kernel,
        out_shape=jax.ShapeDtypeStruct((Bp, 2 * num_keys), jnp.float32),
        grid_spec=pltpu.PrefetchScalarGridSpec(
            num_scalar_prefetch=0,
            grid=(Bp // T,),
            in_specs=[
                pl.BlockSpec((T, dim), lambda i: (i, 0)),
                pl.BlockSpec((dim, 2 * num_keys), lambda i: (0, 0)),  # resident weight
            ],
            out_specs=pl.BlockSpec((T, 2 * num_keys), lambda i: (i, 0)),
        ),
        compiler_params=pltpu.CompilerParams(
            dimension_semantics=("parallel",),
        ),
    )(q, w_sim)

    return out[:B]                                       # drop any padding rows


# ---------------------------------------------------------------------------
# Pure-JAX reference for correctness checking (mirrors the PyTorch forward).
# ---------------------------------------------------------------------------
def _reference(query, keys):
    B, dim = query.shape
    q = query.reshape(B, 2, dim // 2)
    dots = jnp.einsum("bkd,nd->bkn", q, keys)
    return dots.reshape(B, -1)


if __name__ == "__main__":
    root = jax.random.PRNGKey(0)
    k_keys, k_q = jax.random.split(root)

    DIM = 32          # hidden
    NUM_KEYS = 16
    B = 2 * 8         # batch=2, seq=8 tokens flattened into query rows

    keys = jax.random.normal(k_keys, (NUM_KEYS, DIM // 2), jnp.float32)
    query = jax.random.normal(k_q, (B, DIM), jnp.float32)

    fwd = jax.jit(functools.partial(product_key_memory_forward, token_tile=512))
    out = jax.block_until_ready(fwd(query, keys))

    ref = _reference(query, keys)
    assert out.shape == (B, 2 * NUM_KEYS)
    assert bool(jnp.all(jnp.isfinite(out)))
    assert bool(jnp.allclose(out, ref, rtol=1e-5, atol=1e-5))
    print("KERNEL_OK")
</pallas_src>

<mosaic_0001>
module attributes {stable_mosaic.version = 11 : i64} {
  func.func @_pkm_kernel(%arg0: i32, %arg1: memref<16x32xf32, #tpu.memory_space<vmem>>, %arg2: memref<32x32xf32, #tpu.memory_space<vmem>>, %arg3: memref<16x32xf32, #tpu.memory_space<vmem>>) attributes {dimension_semantics = [#tpu.dimension_semantics<parallel>], iteration_bounds = array<i64: 1>, scalar_prefetch = 0 : i64, scratch_operands = 0 : i64, tpu.core_type = #tpu.core_type<tc>, window_params = [{transform_indices = @transform_0, window_bounds = array<i64: 16, 32>}, {pipeline_mode = #tpu.pipeline_mode<synchronous>, transform_indices = @transform_1, window_bounds = array<i64: 32, 32>}, {transform_indices = @transform_2, window_bounds = array<i64: 16, 32>}]} {
    %c0 = arith.constant 0 : index
    %c0_0 = arith.constant 0 : index
    %0 = vector.load %arg1[%c0, %c0_0] : memref<16x32xf32, #tpu.memory_space<vmem>>, vector<16x32xf32>
    %c0_1 = arith.constant 0 : index
    %c0_2 = arith.constant 0 : index
    %1 = vector.load %arg2[%c0_1, %c0_2] : memref<32x32xf32, #tpu.memory_space<vmem>>, vector<32x32xf32>
    %cst = arith.constant dense<0.000000e+00> : vector<16x32xf32>
    %2 = tpu.matmul %0, %1, %cst {dimension_numbers = #tpu.dot_dimension_numbers<[1], [0], [0], [1], [0, 0, 1, 1], [], []>} : vector<16x32xf32>, vector<32x32xf32>, vector<16x32xf32> -> vector<16x32xf32>
    %c0_3 = arith.constant 0 : index
    %c0_4 = arith.constant 0 : index
    %3 = vector.load %arg3[%c0_3, %c0_4] : memref<16x32xf32, #tpu.memory_space<vmem>>, vector<16x32xf32>
    tpu.vector_store %arg3[%c0_3, %c0_4], %2 {strides = array<i32>} : memref<16x32xf32, #tpu.memory_space<vmem>>, vector<16x32xf32>,
    return
  }
  func.func @transform_0(%arg0: i32) -> (i32, i32) {
    %c0_i32 = arith.constant 0 : i32
    %c0_i32_0 = arith.constant 0 : i32
    return %arg0, %c0_i32 : i32, i32
  }
  func.func @transform_1(%arg0: i32) -> (i32, i32) {
    %c0_i32 = arith.constant 0 : i32
    %c0_i32_0 = arith.constant 0 : i32
    %c0_i32_1 = arith.constant 0 : i32
    return %c0_i32, %c0_i32_0 : i32, i32
  }
  func.func @transform_2(%arg0: i32) -> (i32, i32) {
    %c0_i32 = arith.constant 0 : i32
    %c0_i32_0 = arith.constant 0 : i32
    return %arg0, %c0_i32 : i32, i32
  }
}

</mosaic_0001>

<llo_original>
// kernel: product_key_memory_forward.1
$region0: #{product_key_memory_forward.1}
  #allocation0 [shape = 'u32[]', space=smem, size = 0x4, offset = 0x4, fixed_abs, tag = 'smem constant byte address 0x4 - core index']
  #allocation1 [shape = 'u32[144,128]{1,0:T(1,128)}', space=vmem, size = 0x12000, scoped, tag = 'internal scratch']
  %s0 = inlined_call_operand.vmem [shape: f32[16,32], index: 0, kind: input, shape index: {}]
  %s1 = inlined_call_operand.vmem [shape: f32[32,32], index: 1, kind: input, shape index: {}]
  %s2 = inlined_call_operand.hbm [shape: f32[16,32], index: 2, kind: output, shape index: {}]
  %s3 = sld [smem:[#allocation0]]
  $region18: #{product_key_memory_forward.1} parent=0
    _
  %s5 = ssub.s32 1, %s3
  %s6 = scalar_select 0, %s5, %s3
  $region1: #{product_key_memory_forward.1} parent=0
    #allocation2 [shape = 'u8[8192]{0}', space=vmem, size = 0x2000, scoped, tag = 'output window, operand 0, single buffered']
    #allocation3 [shape = 's32[1]{0}', space=sflag, size = 0x4, scoped, tag = 'scoped memory for product_key_memory_forward.1']
    %7 = vsyncpa [#allocation3], 0
    // Predicated region
    $region2: #{product_key_memory_forward.1} parent=1 // pred_check
      _
    $region3: #{product_key_memory_forward.1} parent=1 // pred_check_branch
      %9 = sbr.rel (0) target = $region5
    $region4: #{product_key_memory_forward.1} parent=1 // pred_region
      _
    $region5: #{product_key_memory_forward.1} parent=1 // pred_fallthru
      _
    // Predicated region
    $region6: #{product_key_memory_forward.1} parent=1 // pred_check
      _
    $region7: #{product_key_memory_forward.1} parent=1 // pred_check_branch
      %11 = sbr.rel (0) target = $region9
    $region8: #{product_key_memory_forward.1} parent=1 // pred_region
      _
    $region9: #{product_key_memory_forward.1} parent=1 // pred_fallthru
      _
    %v12 = vld [vmem:[%s0] sm:$0xff]
    %v13 = vld [vmem:[%s0 + $0x8] sm:$0xff]
    %v14 = vld [vmem:[%s1] sm:$0xff]
    %v15 = vld [vmem:[%s1 + $0x8] sm:$0xff]
    %v16 = vld [vmem:[%s1 + $0x10] sm:$0xff]
    %v17 = vld [vmem:[%s1 + $0x18] sm:$0xff]
    %vm18 = vcmask 261120
    %v20 = vsel %vm18, %v12, 0
    %v23 = vsel %vm18, %v13, 0
    %25 = vmatprep.subr.mxu0 0.0
    %26 = vmatpush1.msra.mxu0 0.0
    %27 = vmatprep.subr.mxu0 0.0
    %28 = vmatpush1.msra.mxu0 0.0
    %29 = vmatprep.subr.mxu0 0.0
    %30 = vmatpush1.msra.mxu0 0.0
    %31 = vmatprep.subr.mxu0 0.0
    %32 = vmatpush1.msra.mxu0 0.0
    %33 = vmatprep.subr.mxu0 0.0
    %34 = vmatpush1.msra.mxu0 0.0
    %35 = vmatprep.subr.mxu0 0.0
    %36 = vmatpush1.msra.mxu0 0.0
    %37 = vmatprep.subr.mxu0 0.0
    %38 = vmatpush1.msra.mxu0 0.0
    %39 = vmatprep.subr.mxu0 0.0
    %40 = vmatpush1.msra.mxu0 0.0
    %41 = vmatprep.subr.mxu0 0.0
    %42 = vmatpush1.msra.mxu0 0.0
    %43 = vmatprep.subr.mxu0 0.0
    %44 = vmatpush1.msra.mxu0 0.0
    %45 = vmatprep.subr.mxu0 0.0
    %46 = vmatpush1.msra.mxu0 0.0
    %47 = vmatprep.subr.mxu0 0.0
    %48 = vmatpush1.msra.mxu0 0.0
    %49 = vmatprep.subr.mxu0 0.0
    %50 = vmatpush1.msra.mxu0 %v17
    %51 = vmatprep.subr.mxu0 0.0
    %52 = vmatpush1.msra.mxu0 %v16
    %53 = vmatprep.subr.mxu0 0.0
    %54 = vmatpush1.msra.mxu0 %v15
    %55 = vmatprep.subr.mxu0 0.0
    %56 = vmatpush1.msra.mxu0 %v14
    %57 = vmatprep.subr.mxu0 0.0
    %58 = vmatpush2.msra.mxu0 0.0
    %59 = vmatprep.subr.mxu0 0.0
    %60 = vmatpush2.msra.mxu0 0.0
    %61 = vmatprep.subr.mxu0 0.0
    %62 = vmatpush2.msra.mxu0 0.0
    %63 = vmatprep.subr.mxu0 0.0
    %64 = vmatpush2.msra.mxu0 0.0
    %65 = vmatprep.subr.mxu0 0.0
    %66 = vmatpush2.msra.mxu0 0.0
    %67 = vmatprep.subr.mxu0 0.0
    %68 = vmatpush2.msra.mxu0 0.0
    %69 = vmatprep.subr.mxu0 0.0
    %70 = vmatpush2.msra.mxu0 0.0
    %71 = vmatprep.subr.mxu0 0.0
    %72 = vmatpush2.msra.mxu0 0.0
    %73 = vmatprep.subr.mxu0 0.0
    %74 = vmatpush2.msra.mxu0 0.0
    %75 = vmatprep.subr.mxu0 0.0
    %76 = vmatpush2.msra.mxu0 0.0
    %77 = vmatprep.subr.mxu0 0.0
    %78 = vmatpush2.msra.mxu0 0.0
    %79 = vmatprep.subr.mxu0 0.0
    %80 = vmatpush2.msra.mxu0 0.0
    %81 = vmatprep.subr.mxu0 0.0
    %82 = vmatpush2.msra.mxu0 0.0
    %83 = vmatprep.subr.mxu0 0.0
    %84 = vmatpush2.msra.mxu0 0.0
    %85 = vmatprep.subr.mxu0 0.0
    %86 = vmatpush2.msra.mxu0 0.0
    %87 = vmatprep.subr.mxu0 0.0
    %88 = vmatpush2.msra.mxu0 0.0
    %89 = vmatprep.mubr.f32.mxu0 0.0
    %90 = vmatmul.mubr.f32.gmra.mxu0 %v20
    %v91 = vpop.f32.mrf.mxu0
    %v92 = vadd.f32 0.0, %v91
    %v93 = vpop.f32.mrf.mxu0
    %94 = vmatprep.mubr.f32.mxu0 0.0
    %95 = vmatmul.mubr.f32.gmra.mxu0 %v23
    %v96 = vpop.f32.mrf.mxu0
    %v97 = vadd.f32 0.0, %v96
    %v98 = vpop.f32.mrf.mxu0
    %99 = vdwg.mxu0
    %100 = vst.msk [vmem:[#allocation2] sm:$0xff] %vm18, %v92
    %101 = vst.msk [vmem:[#allocation2 + $0x8] sm:$0xff] %vm18, %v97
    // Predicated region
    $region10: #{product_key_memory_forward.1} parent=1 // pred_check
      _
    $region11: #{product_key_memory_forward.1} parent=1 // pred_check_branch
      %103 = sbr.rel (0) target = $region13
    $region12: #{product_key_memory_forward.1} parent=1 // pred_region
      %s105 = ssub.s32 256, 256
      %106 = vsyncadd [#allocation3], %s105
      %s107 = sshll.u32 [#allocation2], 4
      %s108 = int_to_ptr.vmem [resolvable:$true] %s107
      %113 = dma.vmem_to_hbm [thread:$0]  %s108, 256, %s2, [#allocation3], 128, 128, 8
    $region13: #{product_key_memory_forward.1} parent=1 // pred_fallthru
      _
    // Predicated region
    $region14: #{product_key_memory_forward.1} parent=1 // pred_check
      _
    $region15: #{product_key_memory_forward.1} parent=1 // pred_check_branch
      %115 = sbr.rel (0) target = $region17
    $region16: #{product_key_memory_forward.1} parent=1 // pred_region
      %116 = dma.done [#allocation3], 256
    $region17: #{product_key_memory_forward.1} parent=1 // pred_fallthru
      _
    %117 = vsyncpa [#allocation3], 1

</llo_original>
